<compile_context>
chip_gen: v6e
topology: v6e:2x2x1
jax: 0.10.0
libtpu: 0.0.40
codegen_flags: <defaults>
</compile_context>

<pallas_src>
import jax
import jax.numpy as jnp
from jax.experimental import pallas as pl
from jax.experimental.pallas import tpu as pltpu


def _round_up(x, m):
    return ((x + m - 1) // m) * m


# -----------------------------------------------------------------------------
# Kernel: fused twin-Q MLP over one batch tile.
#   h1 = relu(state @ Ws + action @ Wa + b1)      (TB, H1P)
#   h2 = relu(h1 @ W2 + b2)                       (TB, H2P)   (W2 block-diagonal)
#   q  = h2 @ W3 + b3                             (TB, 128)   (lanes 0/1 = q1/q2)
# -----------------------------------------------------------------------------
def _qnet_fused_kernel(state_ref, action_ref,
                       ws_ref, wa_ref, b1_ref,
                       w2_ref, b2_ref,
                       w3_ref, b3_ref,
                       out_ref):
    h1 = (jnp.dot(state_ref[...], ws_ref[...], preferred_element_type=jnp.float32)
          + jnp.dot(action_ref[...], wa_ref[...], preferred_element_type=jnp.float32)
          + b1_ref[...])
    h1 = jnp.maximum(h1, 0.0)

    h2 = jnp.dot(h1, w2_ref[...], preferred_element_type=jnp.float32) + b2_ref[...]
    h2 = jnp.maximum(h2, 0.0)

    q = jnp.dot(h2, w3_ref[...], preferred_element_type=jnp.float32) + b3_ref[...]
    out_ref[...] = q.astype(out_ref.dtype)


# -----------------------------------------------------------------------------
# Parameter init (PyTorch nn.Linear layout: W (out, in), b (out,)).
# -----------------------------------------------------------------------------
def init_qnetwork_params(key, state_size, action_size, fc_1, fc_2):
    dims = [
        ("layer1", state_size + action_size, fc_1),
        ("layer2", fc_1, fc_2),
        ("layer3", fc_2, 1),
        ("layer4", state_size + action_size, fc_1),
        ("layer5", fc_1, fc_2),
        ("layer6", fc_2, 1),
    ]
    params = {}
    keys = jax.random.split(key, 2 * len(dims))
    for i, (name, fan_in, fan_out) in enumerate(dims):
        bound = 1.0 / jnp.sqrt(fan_in)
        w = jax.random.uniform(keys[2 * i], (fan_out, fan_in),
                               minval=-bound, maxval=bound, dtype=jnp.float32)
        b = jax.random.uniform(keys[2 * i + 1], (fan_out,),
                               minval=-bound, maxval=bound, dtype=jnp.float32)
        params[name] = (w, b)
    return params


# -----------------------------------------------------------------------------
# One-time packing: transpose to (in, out), fuse the twin heads, pad to 128
# lanes with zeros. Called once at setup, NOT per forward call.
# -----------------------------------------------------------------------------
def pack_qnetwork_params(params, state_size, action_size, fc_1, fc_2,
                         dtype=jnp.float32):
    h1p = _round_up(2 * fc_1, 128)
    h2p = _round_up(2 * fc_2, 128)
    outp = 128

    w1, b1 = params["layer1"]
    w2, b2 = params["layer2"]
    w3, b3 = params["layer3"]
    w4, b4 = params["layer4"]
    w5, b5 = params["layer5"]
    w6, b6 = params["layer6"]

    w1t = w1.T.astype(dtype)  # (state+action, fc_1)
    w4t = w4.T.astype(dtype)

    # Layer 1|4, split into state / action parts (removes the concat).
    ws = jnp.zeros((state_size, h1p), dtype)
    ws = ws.at[:, :fc_1].set(w1t[:state_size])
    ws = ws.at[:, fc_1:2 * fc_1].set(w4t[:state_size])
    wa = jnp.zeros((action_size, h1p), dtype)
    wa = wa.at[:, :fc_1].set(w1t[state_size:])
    wa = wa.at[:, fc_1:2 * fc_1].set(w4t[state_size:])
    b1p = jnp.zeros((1, h1p), dtype)
    b1p = b1p.at[0, :fc_1].set(b1.astype(dtype))
    b1p = b1p.at[0, fc_1:2 * fc_1].set(b4.astype(dtype))

    # Layer 2|5: block-diagonal (off-diagonal blocks exactly zero).
    w2p = jnp.zeros((h1p, h2p), dtype)
    w2p = w2p.at[:fc_1, :fc_2].set(w2.T.astype(dtype))
    w2p = w2p.at[fc_1:2 * fc_1, fc_2:2 * fc_2].set(w5.T.astype(dtype))
    b2p = jnp.zeros((1, h2p), dtype)
    b2p = b2p.at[0, :fc_2].set(b2.astype(dtype))
    b2p = b2p.at[0, fc_2:2 * fc_2].set(b5.astype(dtype))

    # Layer 3|6: single (h2p, 128) weight; lane 0 -> q1, lane 1 -> q2.
    w3p = jnp.zeros((h2p, outp), dtype)
    w3p = w3p.at[:fc_2, 0].set(w3.T[:, 0].astype(dtype))
    w3p = w3p.at[fc_2:2 * fc_2, 1].set(w6.T[:, 0].astype(dtype))
    b3p = jnp.zeros((1, outp), dtype)
    b3p = b3p.at[0, 0].set(b3[0].astype(dtype))
    b3p = b3p.at[0, 1].set(b6[0].astype(dtype))

    return {"ws": ws, "wa": wa, "b1": b1p,
            "w2": w2p, "b2": b2p,
            "w3": w3p, "b3": b3p,
            "out_pad": outp}


# -----------------------------------------------------------------------------
# Forward: Pallas-backed equivalent of QNetwork.forward -> (q1, q2).
# -----------------------------------------------------------------------------
def qnetwork_forward(packed, state, action, *, max_batch_tile=1024):
    B = state.shape[0]
    state_size = state.shape[1]
    action_size = action.shape[1]
    dtype = packed["ws"].dtype
    state = state.astype(dtype)
    action = action.astype(dtype)

    h1p = packed["ws"].shape[1]
    h2p = packed["w2"].shape[1]
    outp = packed["out_pad"]

    # Batch tile: whole batch for small B (single grid step), otherwise tile
    # rows so activation DMA double-buffers and the batch axis can shard
    # across TensorCores on v7x. Weights stay VMEM-resident across the grid.
    if B <= max_batch_tile:
        tb = B
    else:
        tb = max_batch_tile  # multiple of 8; Pallas masks the ragged last tile
    grid = (pl.cdiv(B, tb),)

    batch_map = lambda i: (i, 0)
    fixed_map = lambda i: (0, 0)

    grid_spec = pltpu.PrefetchScalarGridSpec(
        num_scalar_prefetch=0,
        grid=grid,
        in_specs=[
            pl.BlockSpec((tb, state_size), batch_map),   # state
            pl.BlockSpec((tb, action_size), batch_map),  # action
            pl.BlockSpec((state_size, h1p), fixed_map),  # Ws
            pl.BlockSpec((action_size, h1p), fixed_map),  # Wa
            pl.BlockSpec((1, h1p), fixed_map),           # b1
            pl.BlockSpec((h1p, h2p), fixed_map),         # W2
            pl.BlockSpec((1, h2p), fixed_map),           # b2
            pl.BlockSpec((h2p, outp), fixed_map),        # W3
            pl.BlockSpec((1, outp), fixed_map),          # b3
        ],
        out_specs=pl.BlockSpec((tb, outp), batch_map),
    )

    out = pl.pallas_call(
        _qnet_fused_kernel,
        out_shape=jax.ShapeDtypeStruct((B, outp), jnp.float32),
        grid_spec=grid_spec,
        compiler_params=pltpu.CompilerParams(
            dimension_semantics=("parallel",),
        ),
    )(state, action,
      packed["ws"], packed["wa"], packed["b1"],
      packed["w2"], packed["b2"],
      packed["w3"], packed["b3"])

    q1 = out[:, 0:1]
    q2 = out[:, 1:2]
    return q1, q2


# -----------------------------------------------------------------------------
# Pure-JAX reference mirroring the PyTorch module, for verification.
# -----------------------------------------------------------------------------
def _reference_forward(params, state, action):
    xu = jnp.concatenate([state, action], axis=1)

    def lin(name, x):
        w, b = params[name]
        return x @ w.T + b

    x1 = jax.nn.relu(lin("layer1", xu))
    x2 = jax.nn.relu(lin("layer2", x1))
    x3 = lin("layer3", x2)
    x4 = jax.nn.relu(lin("layer4", xu))
    x5 = jax.nn.relu(lin("layer5", x4))
    x6 = lin("layer6", x5)
    return x3, x6


if __name__ == "__main__":
    state_size, action_size = 8, 4
    fc_1, fc_2 = 32, 32
    batch = 2

    key = jax.random.PRNGKey(0)
    k_params, k_state, k_action = jax.random.split(key, 3)

    params = init_qnetwork_params(k_params, state_size, action_size, fc_1, fc_2)
    packed = pack_qnetwork_params(params, state_size, action_size, fc_1, fc_2)

    state = jax.random.normal(k_state, (batch, state_size), dtype=jnp.float32)
    action = jax.random.normal(k_action, (batch, action_size), dtype=jnp.float32)

    q1, q2 = qnetwork_forward(packed, state, action)
    q1 = jax.block_until_ready(q1)
    q2 = jax.block_until_ready(q2)

    r1, r2 = _reference_forward(params, state, action)
    assert q1.shape == (batch, 1) and q2.shape == (batch, 1)
    assert jnp.allclose(q1, r1, atol=1e-5, rtol=1e-5)
    assert jnp.allclose(q2, r2, atol=1e-5, rtol=1e-5)

    print("KERNEL_OK")
</pallas_src>

<mosaic_0001>
module attributes {stable_mosaic.version = 11 : i64} {
  func.func @_qnet_fused_kernel(%arg0: i32, %arg1: memref<2x8xf32, #tpu.memory_space<vmem>>, %arg2: memref<2x4xf32, #tpu.memory_space<vmem>>, %arg3: memref<8x128xf32, #tpu.memory_space<vmem>>, %arg4: memref<4x128xf32, #tpu.memory_space<vmem>>, %arg5: memref<1x128xf32, #tpu.memory_space<vmem>>, %arg6: memref<128x128xf32, #tpu.memory_space<vmem>>, %arg7: memref<1x128xf32, #tpu.memory_space<vmem>>, %arg8: memref<128x128xf32, #tpu.memory_space<vmem>>, %arg9: memref<1x128xf32, #tpu.memory_space<vmem>>, %arg10: memref<2x128xf32, #tpu.memory_space<vmem>>) attributes {dimension_semantics = [#tpu.dimension_semantics<parallel>], iteration_bounds = array<i64: 1>, scalar_prefetch = 0 : i64, scratch_operands = 0 : i64, tpu.core_type = #tpu.core_type<tc>, window_params = [{transform_indices = @transform_0, window_bounds = array<i64: 2, 8>}, {transform_indices = @transform_1, window_bounds = array<i64: 2, 4>}, {pipeline_mode = #tpu.pipeline_mode<synchronous>, transform_indices = @transform_2, window_bounds = array<i64: 8, 128>}, {pipeline_mode = #tpu.pipeline_mode<synchronous>, transform_indices = @transform_3, window_bounds = array<i64: 4, 128>}, {pipeline_mode = #tpu.pipeline_mode<synchronous>, transform_indices = @transform_4, window_bounds = array<i64: 1, 128>}, {pipeline_mode = #tpu.pipeline_mode<synchronous>, transform_indices = @transform_5, window_bounds = array<i64: 128, 128>}, {pipeline_mode = #tpu.pipeline_mode<synchronous>, transform_indices = @transform_6, window_bounds = array<i64: 1, 128>}, {pipeline_mode = #tpu.pipeline_mode<synchronous>, transform_indices = @transform_7, window_bounds = array<i64: 128, 128>}, {pipeline_mode = #tpu.pipeline_mode<synchronous>, transform_indices = @transform_8, window_bounds = array<i64: 1, 128>}, {transform_indices = @transform_9, window_bounds = array<i64: 2, 128>}]} {
    %c0 = arith.constant 0 : index
    %c0_0 = arith.constant 0 : index
    %0 = vector.load %arg1[%c0, %c0_0] : memref<2x8xf32, #tpu.memory_space<vmem>>, vector<2x8xf32>
    %c0_1 = arith.constant 0 : index
    %c0_2 = arith.constant 0 : index
    %1 = vector.load %arg3[%c0_1, %c0_2] : memref<8x128xf32, #tpu.memory_space<vmem>>, vector<8x128xf32>
    %cst = arith.constant dense<0.000000e+00> : vector<2x128xf32>
    %2 = tpu.matmul %0, %1, %cst {dimension_numbers = #tpu.dot_dimension_numbers<[1], [0], [0], [1], [0, 0, 1, 1], [], []>} : vector<2x8xf32>, vector<8x128xf32>, vector<2x128xf32> -> vector<2x128xf32>
    %c0_3 = arith.constant 0 : index
    %c0_4 = arith.constant 0 : index
    %3 = vector.load %arg2[%c0_3, %c0_4] : memref<2x4xf32, #tpu.memory_space<vmem>>, vector<2x4xf32>
    %c0_5 = arith.constant 0 : index
    %c0_6 = arith.constant 0 : index
    %4 = vector.load %arg4[%c0_5, %c0_6] : memref<4x128xf32, #tpu.memory_space<vmem>>, vector<4x128xf32>
    %cst_7 = arith.constant dense<0.000000e+00> : vector<2x128xf32>
    %5 = tpu.matmul %3, %4, %cst_7 {dimension_numbers = #tpu.dot_dimension_numbers<[1], [0], [0], [1], [0, 0, 1, 1], [], []>} : vector<2x4xf32>, vector<4x128xf32>, vector<2x128xf32> -> vector<2x128xf32>
    %6 = arith.addf %2, %5 : vector<2x128xf32>
    %c0_8 = arith.constant 0 : index
    %c0_9 = arith.constant 0 : index
    %7 = vector.load %arg5[%c0_8, %c0_9] : memref<1x128xf32, #tpu.memory_space<vmem>>, vector<1x128xf32>
    %8 = vector.broadcast %7 : vector<1x128xf32> to vector<2x128xf32>
    %9 = arith.addf %6, %8 : vector<2x128xf32>
    %cst_10 = arith.constant 0.000000e+00 : f32
    %10 = vector.broadcast %cst_10 : f32 to vector<2x128xf32>
    %11 = arith.maximumf %9, %10 : vector<2x128xf32>
    %c0_11 = arith.constant 0 : index
    %c0_12 = arith.constant 0 : index
    %12 = vector.load %arg6[%c0_11, %c0_12] : memref<128x128xf32, #tpu.memory_space<vmem>>, vector<128x128xf32>
    %cst_13 = arith.constant dense<0.000000e+00> : vector<2x128xf32>
    %13 = tpu.matmul %11, %12, %cst_13 {dimension_numbers = #tpu.dot_dimension_numbers<[1], [0], [0], [1], [0, 0, 1, 1], [], []>} : vector<2x128xf32>, vector<128x128xf32>, vector<2x128xf32> -> vector<2x128xf32>
    %c0_14 = arith.constant 0 : index
    %c0_15 = arith.constant 0 : index
    %14 = vector.load %arg7[%c0_14, %c0_15] : memref<1x128xf32, #tpu.memory_space<vmem>>, vector<1x128xf32>
    %15 = vector.broadcast %14 : vector<1x128xf32> to vector<2x128xf32>
    %16 = arith.addf %13, %15 : vector<2x128xf32>
    %cst_16 = arith.constant 0.000000e+00 : f32
    %17 = vector.broadcast %cst_16 : f32 to vector<2x128xf32>
    %18 = arith.maximumf %16, %17 : vector<2x128xf32>
    %c0_17 = arith.constant 0 : index
    %c0_18 = arith.constant 0 : index
    %19 = vector.load %arg8[%c0_17, %c0_18] : memref<128x128xf32, #tpu.memory_space<vmem>>, vector<128x128xf32>
    %cst_19 = arith.constant dense<0.000000e+00> : vector<2x128xf32>
    %20 = tpu.matmul %18, %19, %cst_19 {dimension_numbers = #tpu.dot_dimension_numbers<[1], [0], [0], [1], [0, 0, 1, 1], [], []>} : vector<2x128xf32>, vector<128x128xf32>, vector<2x128xf32> -> vector<2x128xf32>
    %c0_20 = arith.constant 0 : index
    %c0_21 = arith.constant 0 : index
    %21 = vector.load %arg9[%c0_20, %c0_21] : memref<1x128xf32, #tpu.memory_space<vmem>>, vector<1x128xf32>
    %22 = vector.broadcast %21 : vector<1x128xf32> to vector<2x128xf32>
    %23 = arith.addf %20, %22 : vector<2x128xf32>
    %c0_22 = arith.constant 0 : index
    %c0_23 = arith.constant 0 : index
    %24 = vector.load %arg10[%c0_22, %c0_23] : memref<2x128xf32, #tpu.memory_space<vmem>>, vector<2x128xf32>
    tpu.vector_store %arg10[%c0_22, %c0_23], %23 {strides = array<i32>} : memref<2x128xf32, #tpu.memory_space<vmem>>, vector<2x128xf32>,
    return
  }
  func.func @transform_0(%arg0: i32) -> (i32, i32) {
    %c0_i32 = arith.constant 0 : i32
    %c0_i32_0 = arith.constant 0 : i32
    return %arg0, %c0_i32 : i32, i32
  }
  func.func @transform_1(%arg0: i32) -> (i32, i32) {
    %c0_i32 = arith.constant 0 : i32
    %c0_i32_0 = arith.constant 0 : i32
    return %arg0, %c0_i32 : i32, i32
  }
  func.func @transform_2(%arg0: i32) -> (i32, i32) {
    %c0_i32 = arith.constant 0 : i32
    %c0_i32_0 = arith.constant 0 : i32
    %c0_i32_1 = arith.constant 0 : i32
    return %c0_i32, %c0_i32_0 : i32, i32
  }
  func.func @transform_3(%arg0: i32) -> (i32, i32) {
    %c0_i32 = arith.constant 0 : i32
    %c0_i32_0 = arith.constant 0 : i32
    %c0_i32_1 = arith.constant 0 : i32
    return %c0_i32, %c0_i32_0 : i32, i32
  }
  func.func @transform_4(%arg0: i32) -> (i32, i32) {
    %c0_i32 = arith.constant 0 : i32
    %c0_i32_0 = arith.constant 0 : i32
    %c0_i32_1 = arith.constant 0 : i32
    return %c0_i32, %c0_i32_0 : i32, i32
  }
  func.func @transform_5(%arg0: i32) -> (i32, i32) {
    %c0_i32 = arith.constant 0 : i32
    %c0_i32_0 = arith.constant 0 : i32
    %c0_i32_1 = arith.constant 0 : i32
    return %c0_i32, %c0_i32_0 : i32, i32
  }
  func.func @transform_6(%arg0: i32) -> (i32, i32) {
    %c0_i32 = arith.constant 0 : i32
    %c0_i32_0 = arith.constant 0 : i32
    %c0_i32_1 = arith.constant 0 : i32
    return %c0_i32, %c0_i32_0 : i32, i32
  }
  func.func @transform_7(%arg0: i32) -> (i32, i32) {
    %c0_i32 = arith.constant 0 : i32
    %c0_i32_0 = arith.constant 0 : i32
    %c0_i32_1 = arith.constant 0 : i32
    return %c0_i32, %c0_i32_0 : i32, i32
  }
  func.func @transform_8(%arg0: i32) -> (i32, i32) {
    %c0_i32 = arith.constant 0 : i32
    %c0_i32_0 = arith.constant 0 : i32
    %c0_i32_1 = arith.constant 0 : i32
    return %c0_i32, %c0_i32_0 : i32, i32
  }
  func.func @transform_9(%arg0: i32) -> (i32, i32) {
    %c0_i32 = arith.constant 0 : i32
    %c0_i32_0 = arith.constant 0 : i32
    return %arg0, %c0_i32 : i32, i32
  }
}

</mosaic_0001>

<llo_original>
// kernel: tpu_custom_call.1
$region0: #{tpu_custom_call.1}
  #allocation0 [shape = 'u32[]', space=smem, size = 0x4, offset = 0x4, fixed_abs, tag = 'smem constant byte address 0x4 - core index']
  #allocation1 [shape = 'u32[144,128]{1,0:T(1,128)}', space=vmem, size = 0x12000, scoped, tag = 'internal scratch']
  %s0 = inlined_call_operand.hbm [shape: f32[2,8], index: 0, kind: input, shape index: {}]
  %s1 = inlined_call_operand.hbm [shape: f32[2,4], index: 1, kind: input, shape index: {}]
  %s2 = inlined_call_operand.hbm [shape: f32[8,128], index: 2, kind: input, shape index: {}]
  %s3 = inlined_call_operand.vmem [shape: f32[4,128], index: 3, kind: input, shape index: {}]
  %s4 = inlined_call_operand.vmem [shape: f32[1,128], index: 4, kind: input, shape index: {}]
  %s5 = inlined_call_operand.hbm [shape: f32[128,128], index: 5, kind: input, shape index: {}]
  %s6 = inlined_call_operand.vmem [shape: f32[1,128], index: 6, kind: input, shape index: {}]
  %s7 = inlined_call_operand.hbm [shape: f32[128,128], index: 7, kind: input, shape index: {}]
  %s8 = inlined_call_operand.vmem [shape: f32[1,128], index: 8, kind: input, shape index: {}]
  %s9 = inlined_call_operand.hbm [shape: f32[2,128], index: 9, kind: output, shape index: {}]
  %s10 = sld [smem:[#allocation0]]
  $region66: #{tpu_custom_call.1} parent=0
    _
  %s12 = ssub.s32 1, %s10
  %s13 = scalar_select 0, %s12, %s10
  $region1: #{tpu_custom_call.1} parent=0
    #allocation2 [shape = 'u8[1024]{0}', space=vmem, size = 0x400, scoped, tag = 'input window, operand 0, single buffered']
    #allocation3 [shape = 's32[1]{0}', space=sflag, size = 0x4, scoped, tag = 'scoped memory for tpu_custom_call.1']
    #allocation4 [shape = 's32[1]{0}', space=sflag, size = 0x4, scoped, tag = 'scoped memory for tpu_custom_call.1']
    #allocation5 [shape = 'u8[1024]{0}', space=vmem, size = 0x400, scoped, tag = 'input window, operand 1, single buffered']
    #allocation6 [shape = 's32[1]{0}', space=sflag, size = 0x4, scoped, tag = 'scoped memory for tpu_custom_call.1']
    #allocation7 [shape = 'u8[4096]{0}', space=vmem, size = 0x1000, scoped, tag = 'input window, operand 2, single buffered']
    #allocation8 [shape = 'u8[65536]{0}', space=vmem, size = 0x10000, scoped, tag = 'input window, operand 5, single buffered']
    #allocation9 [shape = 's32[1]{0}', space=sflag, size = 0x4, scoped, tag = 'scoped memory for tpu_custom_call.1']
    #allocation10 [shape = 'u8[65536]{0}', space=vmem, size = 0x10000, scoped, tag = 'input window, operand 7, single buffered']
    #allocation11 [shape = 'u8[1024]{0}', space=vmem, size = 0x400, scoped, tag = 'output window, operand 0, single buffered']
    %14 = vsyncpa [#allocation3], 0
    %15 = vsyncpa [#allocation6], 0
    %16 = vsyncpa [#allocation9], 0
    %17 = vsyncpa [#allocation4], 0
    // Predicated region
    $region2: #{tpu_custom_call.1} parent=1 // pred_check
      _
    $region3: #{tpu_custom_call.1} parent=1 // pred_check_branch
      %19 = sbr.rel (0) target = $region5
    $region4: #{tpu_custom_call.1} parent=1 // pred_region
      %s21 = ssub.s32 32, 32
      %22 = vsyncadd [#allocation3], %s21
      %s24 = sshll.u32 [#allocation2], 4
      %s25 = int_to_ptr.vmem [resolvable:$true] %s24
      %27 = dma.hbm_to_vmem [thread:$0]  %s0, 32, %s25, [#allocation3]
    $region5: #{tpu_custom_call.1} parent=1 // pred_fallthru
      _
    // Predicated region
    $region6: #{tpu_custom_call.1} parent=1 // pred_check
      _
    $region7: #{tpu_custom_call.1} parent=1 // pred_check_branch
      %29 = sbr.rel (0) target = $region9
    $region8: #{tpu_custom_call.1} parent=1 // pred_region
      %s31 = ssub.s32 32, 32
      %32 = vsyncadd [#allocation6], %s31
      %s34 = sshll.u32 [#allocation5], 4
      %s35 = int_to_ptr.vmem [resolvable:$true] %s34
      %37 = dma.hbm_to_vmem [thread:$0]  %s1, 32, %s35, [#allocation6]
    $region9: #{tpu_custom_call.1} parent=1 // pred_fallthru
      _
    // Predicated region
    $region10: #{tpu_custom_call.1} parent=1 // pred_check
      _
    $region11: #{tpu_custom_call.1} parent=1 // pred_check_branch
      %39 = sbr.rel (0) target = $region13
    $region12: #{tpu_custom_call.1} parent=1 // pred_region
      %s41 = ssub.s32 128, 128
      %42 = vsyncadd [#allocation6], %s41
      %s44 = sshll.u32 [#allocation7], 4
      %s45 = int_to_ptr.vmem [resolvable:$true] %s44
      %47 = dma.hbm_to_vmem [thread:$0]  %s2, 128, %s45, [#allocation6]
    $region13: #{tpu_custom_call.1} parent=1 // pred_fallthru
      _
    // Predicated region
    $region14: #{tpu_custom_call.1} parent=1 // pred_check
      _
    $region15: #{tpu_custom_call.1} parent=1 // pred_check_branch
      %49 = sbr.rel (0) target = $region17
    $region16: #{tpu_custom_call.1} parent=1 // pred_region
      _
    $region17: #{tpu_custom_call.1} parent=1 // pred_fallthru
      _
    // Predicated region
    $region18: #{tpu_custom_call.1} parent=1 // pred_check
      _
    $region19: #{tpu_custom_call.1} parent=1 // pred_check_branch
      %51 = sbr.rel (0) target = $region21
    $region20: #{tpu_custom_call.1} parent=1 // pred_region
      _
    $region21: #{tpu_custom_call.1} parent=1 // pred_fallthru
      _
    // Predicated region
    $region22: #{tpu_custom_call.1} parent=1 // pred_check
      _
    $region23: #{tpu_custom_call.1} parent=1 // pred_check_branch
      %53 = sbr.rel (0) target = $region25
    $region24: #{tpu_custom_call.1} parent=1 // pred_region
      %s55 = ssub.s32 2048, 2048
      %56 = vsyncadd [#allocation9], %s55
      %s57 = sshll.u32 [#allocation8], 4
      %s58 = int_to_ptr.vmem [resolvable:$true] %s57
      %63 = dma.hbm_to_vmem [thread:$0]  %s5, 2048, %s58, [#allocation9], 128, 128, 8
    $region25: #{tpu_custom_call.1} parent=1 // pred_fallthru
      _
    // Predicated region
    $region26: #{tpu_custom_call.1} parent=1 // pred_check
      _
    $region27: #{tpu_custom_call.1} parent=1 // pred_check_branch
      %65 = sbr.rel (0) target = $region29
    $region28: #{tpu_custom_call.1} parent=1 // pred_region
      _
    $region29: #{tpu_custom_call.1} parent=1 // pred_fallthru
      _
    // Predicated region
    $region30: #{tpu_custom_call.1} parent=1 // pred_check
      _
    $region31: #{tpu_custom_call.1} parent=1 // pred_check_branch
      %67 = sbr.rel (0) target = $region33
    $region32: #{tpu_custom_call.1} parent=1 // pred_region
      %s69 = ssub.s32 2048, 2048
      %70 = vsyncadd [#allocation9], %s69
      %s71 = sshll.u32 [#allocation10], 4
      %s72 = int_to_ptr.vmem [resolvable:$true] %s71
      %77 = dma.hbm_to_vmem [thread:$0]  %s7, 2048, %s72, [#allocation9], 128, 128, 8
    $region33: #{tpu_custom_call.1} parent=1 // pred_fallthru
      _
    // Predicated region
    $region34: #{tpu_custom_call.1} parent=1 // pred_check
      _
    $region35: #{tpu_custom_call.1} parent=1 // pred_check_branch
      %79 = sbr.rel (0) target = $region37
    $region36: #{tpu_custom_call.1} parent=1 // pred_region
      _
    $region37: #{tpu_custom_call.1} parent=1 // pred_fallthru
      _
    // Predicated region
    $region38: #{tpu_custom_call.1} parent=1 // pred_check
      _
    $region39: #{tpu_custom_call.1} parent=1 // pred_check_branch
      %81 = sbr.rel (0) target = $region41
    $region40: #{tpu_custom_call.1} parent=1 // pred_region
      %82 = dma.done [#allocation3], 32
    $region41: #{tpu_custom_call.1} parent=1 // pred_fallthru
      _
    // Predicated region
    $region42: #{tpu_custom_call.1} parent=1 // pred_check
      _
    $region43: #{tpu_custom_call.1} parent=1 // pred_check_branch
      %84 = sbr.rel (0) target = $region45
    $region44: #{tpu_custom_call.1} parent=1 // pred_region
      %85 = dma.done [#allocation6], 32
    $region45: #{tpu_custom_call.1} parent=1 // pred_fallthru
      _
    // Predicated region
    $region46: #{tpu_custom_call.1} parent=1 // pred_check
      _
    $region47: #{tpu_custom_call.1} parent=1 // pred_check_branch
      %87 = sbr.rel (0) target = $region49
    $region48: #{tpu_custom_call.1} parent=1 // pred_region
      %88 = dma.done [#allocation6], 128
    $region49: #{tpu_custom_call.1} parent=1 // pred_fallthru
      _
    // Predicated region
    $region50: #{tpu_custom_call.1} parent=1 // pred_check
      _
    $region51: #{tpu_custom_call.1} parent=1 // pred_check_branch
      %90 = sbr.rel (0) target = $region53
    $region52: #{tpu_custom_call.1} parent=1 // pred_region
      %91 = dma.done [#allocation9], 2048
    $region53: #{tpu_custom_call.1} parent=1 // pred_fallthru
      _
    // Predicated region
    $region54: #{tpu_custom_call.1} parent=1 // pred_check
      _
    $region55: #{tpu_custom_call.1} parent=1 // pred_check_branch
      %93 = sbr.rel (0) target = $region57
    $region56: #{tpu_custom_call.1} parent=1 // pred_region
      %94 = dma.done [#allocation9], 2048
    $region57: #{tpu_custom_call.1} parent=1 // pred_fallthru
      _
    %v95 = vld [vmem:[#allocation2] sm:$0x3]
    %v96 = vld [vmem:[#allocation7] sm:$0xff]
    %v97 = vld [vmem:[#allocation5] sm:$0x3]
    %v98 = vld [vmem:[%s3] sm:$0xf]
    %vm99 = vcmask 31744
    %v101 = vsel %vm99, %v97, 0
    %vm103 = vcmask 1043456
    %v105 = vsel %vm103, %v98, 0
    %107 = vmatprep.subr.mxu0 0.0
    %108 = vmatpush1.msra.mxu0 0.0
    %109 = vmatprep.subr.mxu0 0.0
    %110 = vmatpush1.msra.mxu0 0.0
    %111 = vmatprep.subr.mxu0 0.0
    %112 = vmatpush1.msra.mxu0 0.0
    %113 = vmatprep.subr.mxu0 0.0
    %114 = vmatpush1.msra.mxu0 0.0
    %115 = vmatprep.subr.mxu0 0.0
    %116 = vmatpush1.msra.mxu0 0.0
    %117 = vmatprep.subr.mxu0 0.0
    %118 = vmatpush1.msra.mxu0 0.0
    %119 = vmatprep.subr.mxu0 0.0
    %120 = vmatpush1.msra.mxu0 0.0
    %121 = vmatprep.subr.mxu0 0.0
    %122 = vmatpush1.msra.mxu0 0.0
    %123 = vmatprep.subr.mxu0 0.0
    %124 = vmatpush1.msra.mxu0 0.0
    %125 = vmatprep.subr.mxu0 0.0
    %126 = vmatpush1.msra.mxu0 0.0
    %127 = vmatprep.subr.mxu0 0.0
    %128 = vmatpush1.msra.mxu0 0.0
    %129 = vmatprep.subr.mxu0 0.0
    %130 = vmatpush1.msra.mxu0 0.0
    %131 = vmatprep.subr.mxu0 0.0
    %132 = vmatpush1.msra.mxu0 0.0
    %133 = vmatprep.subr.mxu0 0.0
    %134 = vmatpush1.msra.mxu0 0.0
    %135 = vmatprep.subr.mxu0 0.0
    %136 = vmatpush1.msra.mxu0 0.0
    %137 = vmatprep.subr.mxu0 0.0
    %138 = vmatpush1.msra.mxu0 %v105
    %139 = vmatprep.subr.mxu0 0.0
    %140 = vmatpush2.msra.mxu0 0.0
    %141 = vmatprep.subr.mxu0 0.0
    %142 = vmatpush2.msra.mxu0 0.0
    %143 = vmatprep.subr.mxu0 0.0
    %144 = vmatpush2.msra.mxu0 0.0
    %145 = vmatprep.subr.mxu0 0.0
    %146 = vmatpush2.msra.mxu0 0.0
    %147 = vmatprep.subr.mxu0 0.0
    %148 = vmatpush2.msra.mxu0 0.0
    %149 = vmatprep.subr.mxu0 0.0
    %150 = vmatpush2.msra.mxu0 0.0
    %151 = vmatprep.subr.mxu0 0.0
    %152 = vmatpush2.msra.mxu0 0.0
    %153 = vmatprep.subr.mxu0 0.0
    %154 = vmatpush2.msra.mxu0 0.0
    %155 = vmatprep.subr.mxu0 0.0
    %156 = vmatpush2.msra.mxu0 0.0
    %157 = vmatprep.subr.mxu0 0.0
    %158 = vmatpush2.msra.mxu0 0.0
    %159 = vmatprep.subr.mxu0 0.0
    %160 = vmatpush2.msra.mxu0 0.0
    %161 = vmatprep.subr.mxu0 0.0
    %162 = vmatpush2.msra.mxu0 0.0
    %163 = vmatprep.subr.mxu0 0.0
    %164 = vmatpush2.msra.mxu0 0.0
    %165 = vmatprep.subr.mxu0 0.0
    %166 = vmatpush2.msra.mxu0 0.0
    %167 = vmatprep.subr.mxu0 0.0
    %168 = vmatpush2.msra.mxu0 0.0
    %169 = vmatprep.subr.mxu0 0.0
    %170 = vmatpush2.msra.mxu0 0.0
    %171 = vmatprep.mubr.f32.mxu0 0.0
    %172 = vmatmul.mubr.f32.gmra.mxu0 %v101
    %v173 = vpop.f32.mrf.mxu0
    %v174 = vadd.f32 0.0, %v173
    %v175 = vpop.f32.mrf.mxu0
    %176 = vdwg.mxu0
    %vm177 = vcmask 64512
    %v179 = vsel %vm177, %v95, 0
    %181 = vmatprep.subr.mxu0 0.0
    %182 = vmatpush1.msra.mxu0 0.0
    %183 = vmatprep.subr.mxu0 0.0
    %184 = vmatpush1.msra.mxu0 0.0
    %185 = vmatprep.subr.mxu0 0.0
    %186 = vmatpush1.msra.mxu0 0.0
    %187 = vmatprep.subr.mxu0 0.0
    %188 = vmatpush1.msra.mxu0 0.0
    %189 = vmatprep.subr.mxu0 0.0
    %190 = vmatpush1.msra.mxu0 0.0
    %191 = vmatprep.subr.mxu0 0.0
    %192 = vmatpush1.msra.mxu0 0.0
    %193 = vmatprep.subr.mxu0 0.0
    %194 = vmatpush1.msra.mxu0 0.0
    %195 = vmatprep.subr.mxu0 0.0
    %196 = vmatpush1.msra.mxu0 0.0
    %197 = vmatprep.subr.mxu0 0.0
    %198 = vmatpush1.msra.mxu0 0.0
    %199 = vmatprep.subr.mxu0 0.0
    %200 = vmatpush1.msra.mxu0 0.0
    %201 = vmatprep.subr.mxu0 0.0
    %202 = vmatpush1.msra.mxu0 0.0
    %203 = vmatprep.subr.mxu0 0.0
    %204 = vmatpush1.msra.mxu0 0.0
    %205 = vmatprep.subr.mxu0 0.0
    %206 = vmatpush1.msra.mxu0 0.0
    %207 = vmatprep.subr.mxu0 0.0
    %208 = vmatpush1.msra.mxu0 0.0
    %209 = vmatprep.subr.mxu0 0.0
    %210 = vmatpush1.msra.mxu0 0.0
    %211 = vmatprep.subr.mxu0 0.0
    %212 = vmatpush1.msra.mxu0 %v96
    %213 = vmatprep.subr.mxu0 0.0
    %214 = vmatpush2.msra.mxu0 0.0
    %215 = vmatprep.subr.mxu0 0.0
    %216 = vmatpush2.msra.mxu0 0.0
    %217 = vmatprep.subr.mxu0 0.0
    %218 = vmatpush2.msra.mxu0 0.0
    %219 = vmatprep.subr.mxu0 0.0
    %220 = vmatpush2.msra.mxu0 0.0
    %221 = vmatprep.subr.mxu0 0.0
    %222 = vmatpush2.msra.mxu0 0.0
    %223 = vmatprep.subr.mxu0 0.0
    %224 = vmatpush2.msra.mxu0 0.0
    %225 = vmatprep.subr.mxu0 0.0
    %226 = vmatpush2.msra.mxu0 0.0
    %227 = vmatprep.subr.mxu0 0.0
    %228 = vmatpush2.msra.mxu0 0.0
    %229 = vmatprep.subr.mxu0 0.0
    %230 = vmatpush2.msra.mxu0 0.0
    %231 = vmatprep.subr.mxu0 0.0
    %232 = vmatpush2.msra.mxu0 0.0
    %233 = vmatprep.subr.mxu0 0.0
    %234 = vmatpush2.msra.mxu0 0.0
    %235 = vmatprep.subr.mxu0 0.0
    %236 = vmatpush2.msra.mxu0 0.0
    %237 = vmatprep.subr.mxu0 0.0
    %238 = vmatpush2.msra.mxu0 0.0
    %239 = vmatprep.subr.mxu0 0.0
    %240 = vmatpush2.msra.mxu0 0.0
    %241 = vmatprep.subr.mxu0 0.0
    %242 = vmatpush2.msra.mxu0 0.0
    %243 = vmatprep.subr.mxu0 0.0
    %244 = vmatpush2.msra.mxu0 0.0
    %245 = vmatprep.mubr.f32.mxu0 0.0
    %246 = vmatmul.mubr.f32.gmra.mxu0 %v179
    %v247 = vpop.f32.mrf.mxu0
    %v248 = vadd.f32 %v174, %v247
    %v249 = vpop.f32.mrf.mxu0
    %250 = vdwg.mxu0
    %v251 = vld [vmem:[%s4] sm:$0x1]
    %v253 = vlaneseq
    %v254 = vshrl.u32 %v253, 7
    %v255 = vsub.s32 0, %v254
    %v256 = vrot.slane %v251, %v255
    %v258 = vadd.f32 %v248, %v256
    %v259 = vmax.f32 %v258, 0.0
    %v260 = vld [vmem:[#allocation8] sm:$0xff]
    %v261 = vld [vmem:[#allocation8 + $0x8] sm:$0xff]
    %v262 = vld [vmem:[#allocation8 + $0x10] sm:$0xff]
    %v263 = vld [vmem:[#allocation8 + $0x18] sm:$0xff]
    %v264 = vld [vmem:[#allocation8 + $0x20] sm:$0xff]
    %v265 = vld [vmem:[#allocation8 + $0x28] sm:$0xff]
    %v266 = vld [vmem:[#allocation8 + $0x30] sm:$0xff]
    %v267 = vld [vmem:[#allocation8 + $0x38] sm:$0xff]
    %v268 = vld [vmem:[#allocation8 + $0x40] sm:$0xff]
    %v269 = vld [vmem:[#allocation8 + $0x48] sm:$0xff]
    %v270 = vld [vmem:[#allocation8 + $0x50] sm:$0xff]
    %v271 = vld [vmem:[#allocation8 + $0x58] sm:$0xff]
    %v272 = vld [vmem:[#allocation8 + $0x60] sm:$0xff]
    %v273 = vld [vmem:[#allocation8 + $0x68] sm:$0xff]
    %v274 = vld [vmem:[#allocation8 + $0x70] sm:$0xff]
    %v275 = vld [vmem:[#allocation8 + $0x78] sm:$0xff]
    %v276 = vld [vmem:[%s6] sm:$0x1]
    %v278 = vlaneseq
    %v279 = vshrl.u32 %v278, 7
    %v280 = vsub.s32 0, %v279
    %v281 = vrot.slane %v276, %v280
    %283 = vmatprep.subr.mxu0 0.0
    %284 = vmatpush1.msra.mxu0 %v275
    %285 = vmatprep.subr.mxu0 0.0
    %286 = vmatpush1.msra.mxu0 %v274
    %287 = vmatprep.subr.mxu0 0.0
    %288 = vmatpush1.msra.mxu0 %v273
    %289 = vmatprep.subr.mxu0 0.0
    %290 = vmatpush1.msra.mxu0 %v272
    %291 = vmatprep.subr.mxu0 0.0
    %292 = vmatpush1.msra.mxu0 %v271
    %293 = vmatprep.subr.mxu0 0.0
    %294 = vmatpush1.msra.mxu0 %v270
    %295 = vmatprep.subr.mxu0 0.0
    %296 = vmatpush1.msra.mxu0 %v269
    %297 = vmatprep.subr.mxu0 0.0
    %298 = vmatpush1.msra.mxu0 %v268
    %299 = vmatprep.subr.mxu0 0.0
    %300 = vmatpush1.msra.mxu0 %v267
    %301 = vmatprep.subr.mxu0 0.0
    %302 = vmatpush1.msra.mxu0 %v266
    %303 = vmatprep.subr.mxu0 0.0
    %304 = vmatpush1.msra.mxu0 %v265
    %305 = vmatprep.subr.mxu0 0.0
    %306 = vmatpush1.msra.mxu0 %v264
    %307 = vmatprep.subr.mxu0 0.0
    %308 = vmatpush1.msra.mxu0 %v263
    %309 = vmatprep.subr.mxu0 0.0
    %310 = vmatpush1.msra.mxu0 %v262
    %311 = vmatprep.subr.mxu0 0.0
    %312 = vmatpush1.msra.mxu0 %v261
    %313 = vmatprep.subr.mxu0 0.0
    %314 = vmatpush1.msra.mxu0 %v260
    %315 = vmatprep.subr.mxu0 0.0
    %316 = vmatpush2.msra.mxu0 0.0
    %317 = vmatprep.subr.mxu0 0.0
    %318 = vmatpush2.msra.mxu0 0.0
    %319 = vmatprep.subr.mxu0 0.0
    %320 = vmatpush2.msra.mxu0 0.0
    %321 = vmatprep.subr.mxu0 0.0
    %322 = vmatpush2.msra.mxu0 0.0
    %323 = vmatprep.subr.mxu0 0.0
    %324 = vmatpush2.msra.mxu0 0.0
    %325 = vmatprep.subr.mxu0 0.0
    %326 = vmatpush2.msra.mxu0 0.0
    %327 = vmatprep.subr.mxu0 0.0
    %328 = vmatpush2.msra.mxu0 0.0
    %329 = vmatprep.subr.mxu0 0.0
    %330 = vmatpush2.msra.mxu0 0.0
    %331 = vmatprep.subr.mxu0 0.0
    %332 = vmatpush2.msra.mxu0 0.0
    %333 = vmatprep.subr.mxu0 0.0
    %334 = vmatpush2.msra.mxu0 0.0
    %335 = vmatprep.subr.mxu0 0.0
    %336 = vmatpush2.msra.mxu0 0.0
    %337 = vmatprep.subr.mxu0 0.0
    %338 = vmatpush2.msra.mxu0 0.0
    %339 = vmatprep.subr.mxu0 0.0
    %340 = vmatpush2.msra.mxu0 0.0
    %341 = vmatprep.subr.mxu0 0.0
    %342 = vmatpush2.msra.mxu0 0.0
    %343 = vmatprep.subr.mxu0 0.0
    %344 = vmatpush2.msra.mxu0 0.0
    %345 = vmatprep.subr.mxu0 0.0
    %346 = vmatpush2.msra.mxu0 0.0
    %347 = vmatprep.mubr.f32.mxu0 0.0
    %348 = vmatmul.mubr.f32.gmra.mxu0 %v259
    %v349 = vpop.f32.mrf.mxu0
    %v350 = vadd.f32 %v281, %v349
    %v351 = vpop.f32.mrf.mxu0
    %352 = vdwg.mxu0
    %v353 = vmax.f32 %v350, 0.0
    %v354 = vld [vmem:[#allocation10] sm:$0xff]
    %v355 = vld [vmem:[#allocation10 + $0x8] sm:$0xff]
    %v356 = vld [vmem:[#allocation10 + $0x10] sm:$0xff]
    %v357 = vld [vmem:[#allocation10 + $0x18] sm:$0xff]
    %v358 = vld [vmem:[#allocation10 + $0x20] sm:$0xff]
    %v359 = vld [vmem:[#allocation10 + $0x28] sm:$0xff]
    %v360 = vld [vmem:[#allocation10 + $0x30] sm:$0xff]
    %v361 = vld [vmem:[#allocation10 + $0x38] sm:$0xff]
    %v362 = vld [vmem:[#allocation10 + $0x40] sm:$0xff]
    %v363 = vld [vmem:[#allocation10 + $0x48] sm:$0xff]
    %v364 = vld [vmem:[#allocation10 + $0x50] sm:$0xff]
    %v365 = vld [vmem:[#allocation10 + $0x58] sm:$0xff]
    %v366 = vld [vmem:[#allocation10 + $0x60] sm:$0xff]
    %v367 = vld [vmem:[#allocation10 + $0x68] sm:$0xff]
    %v368 = vld [vmem:[#allocation10 + $0x70] sm:$0xff]
    %v369 = vld [vmem:[#allocation10 + $0x78] sm:$0xff]
    %v370 = vld [vmem:[%s8] sm:$0x1]
    %v372 = vlaneseq
    %v373 = vshrl.u32 %v372, 7
    %v374 = vsub.s32 0, %v373
    %v375 = vrot.slane %v370, %v374
    %377 = vmatprep.subr.mxu0 0.0
    %378 = vmatpush1.msra.mxu0 %v369
    %379 = vmatprep.subr.mxu0 0.0
    %380 = vmatpush1.msra.mxu0 %v368
    %381 = vmatprep.subr.mxu0 0.0
    %382 = vmatpush1.msra.mxu0 %v367
    %383 = vmatprep.subr.mxu0 0.0
    %384 = vmatpush1.msra.mxu0 %v366
    %385 = vmatprep.subr.mxu0 0.0
    %386 = vmatpush1.msra.mxu0 %v365
    %387 = vmatprep.subr.mxu0 0.0
    %388 = vmatpush1.msra.mxu0 %v364
    %389 = vmatprep.subr.mxu0 0.0
    %390 = vmatpush1.msra.mxu0 %v363
    %391 = vmatprep.subr.mxu0 0.0
    %392 = vmatpush1.msra.mxu0 %v362
    %393 = vmatprep.subr.mxu0 0.0
    %394 = vmatpush1.msra.mxu0 %v361
    %395 = vmatprep.subr.mxu0 0.0
    %396 = vmatpush1.msra.mxu0 %v360
    %397 = vmatprep.subr.mxu0 0.0
    %398 = vmatpush1.msra.mxu0 %v359
    %399 = vmatprep.subr.mxu0 0.0
    %400 = vmatpush1.msra.mxu0 %v358
    %401 = vmatprep.subr.mxu0 0.0
    %402 = vmatpush1.msra.mxu0 %v357
    %403 = vmatprep.subr.mxu0 0.0
    %404 = vmatpush1.msra.mxu0 %v356
    %405 = vmatprep.subr.mxu0 0.0
    %406 = vmatpush1.msra.mxu0 %v355
    %407 = vmatprep.subr.mxu0 0.0
    %408 = vmatpush1.msra.mxu0 %v354
    %409 = vmatprep.subr.mxu0 0.0
    %410 = vmatpush2.msra.mxu0 0.0
    %411 = vmatprep.subr.mxu0 0.0
    %412 = vmatpush2.msra.mxu0 0.0
    %413 = vmatprep.subr.mxu0 0.0
    %414 = vmatpush2.msra.mxu0 0.0
    %415 = vmatprep.subr.mxu0 0.0
    %416 = vmatpush2.msra.mxu0 0.0
    %417 = vmatprep.subr.mxu0 0.0
    %418 = vmatpush2.msra.mxu0 0.0
    %419 = vmatprep.subr.mxu0 0.0
    %420 = vmatpush2.msra.mxu0 0.0
    %421 = vmatprep.subr.mxu0 0.0
    %422 = vmatpush2.msra.mxu0 0.0
    %423 = vmatprep.subr.mxu0 0.0
    %424 = vmatpush2.msra.mxu0 0.0
    %425 = vmatprep.subr.mxu0 0.0
    %426 = vmatpush2.msra.mxu0 0.0
    %427 = vmatprep.subr.mxu0 0.0
    %428 = vmatpush2.msra.mxu0 0.0
    %429 = vmatprep.subr.mxu0 0.0
    %430 = vmatpush2.msra.mxu0 0.0
    %431 = vmatprep.subr.mxu0 0.0
    %432 = vmatpush2.msra.mxu0 0.0
    %433 = vmatprep.subr.mxu0 0.0
    %434 = vmatpush2.msra.mxu0 0.0
    %435 = vmatprep.subr.mxu0 0.0
    %436 = vmatpush2.msra.mxu0 0.0
    %437 = vmatprep.subr.mxu0 0.0
    %438 = vmatpush2.msra.mxu0 0.0
    %439 = vmatprep.subr.mxu0 0.0
    %440 = vmatpush2.msra.mxu0 0.0
    %441 = vmatprep.mubr.f32.mxu0 0.0
    %442 = vmatmul.mubr.f32.gmra.mxu0 %v353
    %v443 = vpop.f32.mrf.mxu0
    %v444 = vadd.f32 %v375, %v443
    %v445 = vpop.f32.mrf.mxu0
    %446 = vdwg.mxu0
    %447 = vst [vmem:[#allocation11] sm:$0x3] %v444
    // Predicated region
    $region58: #{tpu_custom_call.1} parent=1 // pred_check
      _
    $region59: #{tpu_custom_call.1} parent=1 // pred_check_branch
      %449 = sbr.rel (0) target = $region61
    $region60: #{tpu_custom_call.1} parent=1 // pred_region
      %s451 = ssub.s32 32, 32
      %452 = vsyncadd [#allocation4], %s451
      %s454 = sshll.u32 [#allocation11], 4
      %s455 = int_to_ptr.vmem [resolvable:$true] %s454
      %457 = dma.vmem_to_hbm [thread:$0]  %s455, 32, %s9, [#allocation4]
    $region61: #{tpu_custom_call.1} parent=1 // pred_fallthru
      _
    // Predicated region
    $region62: #{tpu_custom_call.1} parent=1 // pred_check
      _
    $region63: #{tpu_custom_call.1} parent=1 // pred_check_branch
      %459 = sbr.rel (0) target = $region65
    $region64: #{tpu_custom_call.1} parent=1 // pred_region
      %460 = dma.done [#allocation4], 32
    $region65: #{tpu_custom_call.1} parent=1 // pred_fallthru
      _
    %461 = vsyncpa [#allocation3], 1
    %462 = vsyncpa [#allocation6], 1
    %463 = vsyncpa [#allocation9], 1
    %464 = vsyncpa [#allocation4], 1

</llo_original>
